<compile_context>
chip_gen: v6e
topology: v6e:2x2x1
jax: 0.10.0
libtpu: 0.0.40
codegen_flags: <defaults>
</compile_context>

<pallas_src>
import jax
import jax.numpy as jnp
from jax.experimental import pallas as pl
from jax.experimental.pallas import tpu as pltpu

LN_EPS = 1e-5  # torch.nn.LayerNorm default


def _round_up(a: int, b: int) -> int:
    return ((a + b - 1) // b) * b


def _ln_linear_sigmoid_kernel(x_ref, w_ref, o_ref):
    # x_ref: (tm, D1), w_ref: (D1, D2) bf16, o_ref: (tm, D2)
    x = x_ref[...].astype(jnp.float32)
    d = x.shape[-1]
    inv_d = 1.0 / d  # static python constant

    # LayerNorm (elementwise_affine=False, biased variance, like PyTorch).
    # Two-pass form: mean, then sum((x - mean)^2). x is resident in VMEM, so
    # the second lane reduction is free in this memory-bound kernel and it
    # avoids the E[x^2] - mean^2 cancellation issue.
    mean = jnp.sum(x, axis=-1, keepdims=True) * inv_d
    xc = x - mean
    var = jnp.sum(xc * xc, axis=-1, keepdims=True) * inv_d
    xn = xc * jax.lax.rsqrt(var + LN_EPS)

    # Linear (no bias) on the MXU: bf16 operands, f32 accumulation.
    y = jnp.dot(xn.astype(w_ref.dtype), w_ref[...],
                preferred_element_type=jnp.float32)

    # Numerically stable sigmoid: sigmoid(y) = 0.5 * (tanh(y/2) + 1).
    # Single EUP op per element; VALU stays free for the LayerNorm math.
    o_ref[...] = (0.5 * (jnp.tanh(0.5 * y) + 1.0)).astype(o_ref.dtype)


def ln_linear_sigmoid(x, w, *, tm=None, out_dtype=None):
    """x: [M, D1], w: [D1, D2] (pre-transposed nn.Linear weight) -> [M, D2]."""
    M, D1 = x.shape
    D1w, D2 = w.shape
    assert D1 == D1w, (D1, D1w)

    out_dtype = x.dtype if out_dtype is None else out_dtype
    x_bytes = jnp.dtype(x.dtype).itemsize
    o_bytes = jnp.dtype(out_dtype).itemsize

    # Weight: cast once to bf16 for the MXU (tiny one-off XLA op).
    wb = w if w.dtype == jnp.bfloat16 else w.astype(jnp.bfloat16)

    # ---- Row tile selection -------------------------------------------------
    # Auto tile: as large as possible (cap 4096) while keeping the
    # double-buffered x + out pipeline buffers around ~8 MiB.
    if tm is None:
        per_row = 2 * (D1 * x_bytes + D2 * o_bytes)
        tm = max(256, min(4096, ((8 << 20) // per_row) // 8 * 8))
    Mr = _round_up(M, 8)
    tm_eff = min(tm, Mr)
    # Guarantee >= 2 grid steps for nontrivial M so dimension_semantics
    # ("parallel",) actually splits rows across v7x's two TensorCores (and
    # gives the pipeline something to overlap on v5e/v6e).
    if Mr >= 16:
        tm_eff = min(tm_eff, _round_up((Mr + 1) // 2, 8))
    tm_eff = max(8, (tm_eff // 8) * 8)

    grid = (pl.cdiv(M, tm_eff),)

    # ---- VMEM budget ---------------------------------------------------------
    vmem_need = (2 * tm_eff * (D1 * x_bytes + D2 * o_bytes)  # double-buffered I/O
                 + 2 * D1 * D2 * 2                           # weight (bf16, x2 buf)
                 + tm_eff * (2 * D1 + 2 * D2) * 4)           # f32 intermediates
    vmem_limit = int(min(max(2 * vmem_need, 32 << 20), 48 << 20))

    bytes_accessed = M * D1 * x_bytes + D1 * D2 * 2 + M * D2 * o_bytes

    out = pl.pallas_call(
        _ln_linear_sigmoid_kernel,
        out_shape=jax.ShapeDtypeStruct((M, D2), out_dtype),
        grid_spec=pltpu.PrefetchScalarGridSpec(
            num_scalar_prefetch=0,
            grid=grid,
            in_specs=[
                # x row tile; last dim equals the full array dim (legal for D1<128).
                pl.BlockSpec((tm_eff, D1), lambda i: (i, 0)),
                # Full weight, constant index map (tiny; default double-buffered).
                pl.BlockSpec((D1, D2), lambda i: (0, 0)),
            ],
            # Output at its real width: no D2 padding, partial edge rows masked.
            out_specs=pl.BlockSpec((tm_eff, D2), lambda i: (i, 0)),
        ),
        compiler_params=pltpu.CompilerParams(
            dimension_semantics=("parallel",),
            vmem_limit_bytes=vmem_limit,
        ),
        cost_estimate=pl.CostEstimate(
            flops=2 * M * D1 * D2 + 8 * M * D1,
            transcendentals=M * D2 + M,  # tanh per output elem + rsqrt per row
            bytes_accessed=bytes_accessed,
        ),
    )(x, wb)

    return out


def reference(x, w):
    mean = jnp.mean(x, axis=-1, keepdims=True)
    var = jnp.mean((x - mean) ** 2, axis=-1, keepdims=True)
    xn = (x - mean) / jnp.sqrt(var + LN_EPS)
    return jax.nn.sigmoid(xn @ w)


def _run_case(key, M, fc_dim1, fc_dim2, tm=None, out_dtype=None, tol=1e-2):
    kx, kw = jax.random.split(key)
    x = jax.random.normal(kx, (M, fc_dim1), dtype=jnp.float32)
    # Kaiming-uniform-like init, stored pre-transposed as [fc_dim1, fc_dim2].
    bound = 1.0 / (fc_dim1 ** 0.5)
    w = jax.random.uniform(kw, (fc_dim1, fc_dim2), dtype=jnp.float32,
                           minval=-bound, maxval=bound)

    out = jax.block_until_ready(ln_linear_sigmoid(x, w, tm=tm, out_dtype=out_dtype))
    ref = reference(x, w)
    assert out.shape == (M, fc_dim2), out.shape
    err = float(jnp.max(jnp.abs(out.astype(jnp.float32) - ref)))
    # Tolerance loosened vs. pure-f32 because of bf16 MXU operands (and the
    # optional bf16 output); real bugs produce errors O(0.1+).
    assert err < tol, f"max err {err}"
    return err


if __name__ == "__main__":
    key = jax.random.PRNGKey(0)
    k1, k2, k3 = jax.random.split(key, 3)

    # Module-consistent small shapes: fc_dim1 = 32, fc_dim2 = 16.
    _run_case(k1, M=16, fc_dim1=32, fc_dim2=16)
    # Tail / partial-edge-block path: M not a multiple of 8 or of the tile.
    _run_case(k2, M=13, fc_dim1=32, fc_dim2=16)
    # bf16 output path (halves output writeback; still inside tolerance).
    _run_case(k3, M=64, fc_dim1=32, fc_dim2=16, out_dtype=jnp.bfloat16)

    print("KERNEL_OK")
</pallas_src>

<mosaic_0001>
module attributes {stable_mosaic.version = 11 : i64} {
  func.func @_ln_linear_sigmoid_kernel(%arg0: i32, %arg1: memref<8x32xf32, #tpu.memory_space<vmem>>, %arg2: memref<32x16xbf16, #tpu.memory_space<vmem>>, %arg3: memref<8x16xf32, #tpu.memory_space<vmem>>) attributes {dimension_semantics = [#tpu.dimension_semantics<parallel>], iteration_bounds = array<i64: 2>, scalar_prefetch = 0 : i64, scratch_operands = 0 : i64, tpu.core_type = #tpu.core_type<tc>, window_params = [{transform_indices = @transform_0, window_bounds = array<i64: 8, 32>}, {pipeline_mode = #tpu.pipeline_mode<synchronous>, transform_indices = @transform_1, window_bounds = array<i64: 32, 16>}, {transform_indices = @transform_2, window_bounds = array<i64: 8, 16>}]} {
    %c0 = arith.constant 0 : index
    %c0_0 = arith.constant 0 : index
    %0 = vector.load %arg1[%c0, %c0_0] : memref<8x32xf32, #tpu.memory_space<vmem>>, vector<8x32xf32>
    %cst = arith.constant dense<0.000000e+00> : vector<8xf32>
    %1 = vector.multi_reduction <add>, %0, %cst [1] : vector<8x32xf32> to vector<8xf32>
    %2 = vector.shape_cast %1 : vector<8xf32> to vector<8x1xf32>
    %cst_1 = arith.constant 3.125000e-02 : f32
    %3 = vector.broadcast %cst_1 : f32 to vector<8x1xf32>
    %4 = arith.mulf %2, %3 : vector<8x1xf32>
    %5 = vector.broadcast %4 : vector<8x1xf32> to vector<8x32xf32>
    %6 = arith.subf %0, %5 : vector<8x32xf32>
    %7 = arith.mulf %6, %6 : vector<8x32xf32>
    %cst_2 = arith.constant dense<0.000000e+00> : vector<8xf32>
    %8 = vector.multi_reduction <add>, %7, %cst_2 [1] : vector<8x32xf32> to vector<8xf32>
    %9 = vector.shape_cast %8 : vector<8xf32> to vector<8x1xf32>
    %cst_3 = arith.constant 3.125000e-02 : f32
    %10 = vector.broadcast %cst_3 : f32 to vector<8x1xf32>
    %11 = arith.mulf %9, %10 : vector<8x1xf32>
    %cst_4 = arith.constant 9.99999974E-6 : f32
    %12 = vector.broadcast %cst_4 : f32 to vector<8x1xf32>
    %13 = arith.addf %11, %12 : vector<8x1xf32>
    %14 = math.rsqrt %13 : vector<8x1xf32>
    %15 = vector.broadcast %14 : vector<8x1xf32> to vector<8x32xf32>
    %16 = arith.mulf %6, %15 : vector<8x32xf32>
    %17 = arith.truncf %16 : vector<8x32xf32> to vector<8x32xbf16>
    %c0_5 = arith.constant 0 : index
    %c0_6 = arith.constant 0 : index
    %18 = vector.load %arg2[%c0_5, %c0_6] : memref<32x16xbf16, #tpu.memory_space<vmem>>, vector<32x16xbf16>
    %cst_7 = arith.constant dense<0.000000e+00> : vector<8x16xf32>
    %19 = tpu.matmul %17, %18, %cst_7 {dimension_numbers = #tpu.dot_dimension_numbers<[1], [0], [0], [1], [0, 0, 1, 1], [], []>} : vector<8x32xbf16>, vector<32x16xbf16>, vector<8x16xf32> -> vector<8x16xf32>
    %cst_8 = arith.constant 5.000000e-01 : f32
    %20 = vector.broadcast %cst_8 : f32 to vector<8x16xf32>
    %21 = arith.mulf %20, %19 : vector<8x16xf32>
    %22 = math.tanh %21 : vector<8x16xf32>
    %cst_9 = arith.constant 1.000000e+00 : f32
    %23 = vector.broadcast %cst_9 : f32 to vector<8x16xf32>
    %24 = arith.addf %22, %23 : vector<8x16xf32>
    %cst_10 = arith.constant 5.000000e-01 : f32
    %25 = vector.broadcast %cst_10 : f32 to vector<8x16xf32>
    %26 = arith.mulf %25, %24 : vector<8x16xf32>
    %c0_11 = arith.constant 0 : index
    %c0_12 = arith.constant 0 : index
    %27 = vector.load %arg3[%c0_11, %c0_12] : memref<8x16xf32, #tpu.memory_space<vmem>>, vector<8x16xf32>
    tpu.vector_store %arg3[%c0_11, %c0_12], %26 {strides = array<i32>} : memref<8x16xf32, #tpu.memory_space<vmem>>, vector<8x16xf32>,
    return
  }
  func.func @transform_0(%arg0: i32) -> (i32, i32) {
    %c0_i32 = arith.constant 0 : i32
    %c0_i32_0 = arith.constant 0 : i32
    return %arg0, %c0_i32 : i32, i32
  }
  func.func @transform_1(%arg0: i32) -> (i32, i32) {
    %c0_i32 = arith.constant 0 : i32
    %c0_i32_0 = arith.constant 0 : i32
    %c0_i32_1 = arith.constant 0 : i32
    return %c0_i32, %c0_i32_0 : i32, i32
  }
  func.func @transform_2(%arg0: i32) -> (i32, i32) {
    %c0_i32 = arith.constant 0 : i32
    %c0_i32_0 = arith.constant 0 : i32
    return %arg0, %c0_i32 : i32, i32
  }
}

</mosaic_0001>

<llo_original>
// kernel: tpu_custom_call.1
$region0: #{tpu_custom_call.1}
  #allocation0 [shape = 'u32[]', space=smem, size = 0x4, offset = 0x4, fixed_abs, tag = 'smem constant byte address 0x4 - core index']
  #allocation1 [shape = 'u32[144,128]{1,0:T(1,128)}', space=vmem, size = 0x12000, scoped, tag = 'internal scratch']
  %s0 = inlined_call_operand.vmem [shape: f32[16,32], index: 0, kind: input, shape index: {}]
  %s1 = inlined_call_operand.vmem [shape: bf16[32,16], index: 1, kind: input, shape index: {}]
  %s2 = inlined_call_operand.hbm [shape: f32[16,16], index: 2, kind: output, shape index: {}]
  %s3 = sld [smem:[#allocation0]]
  $region41: #{tpu_custom_call.1} parent=0
    _
  %s5 = ssub.s32 1, %s3
  %s6 = scalar_select 0, %s5, %s3
  $region1: #{tpu_custom_call.1} parent=0
    #allocation2 [shape = 'u8[8192]{0}', space=vmem, size = 0x2000, scoped, tag = 'output window, operand 0']
    #allocation3 [shape = 's32[2]{0}', space=sflag, size = 0x8, scoped, tag = 'scoped memory for tpu_custom_call.1']
    %7 = vsyncpa [#allocation3], 0
    %s8 = scalar_lea.sflag [#allocation3], 1
    %9 = vsyncpa %s8, 0
    loop: start=0, step=1, limit=4
    $region2: #{tpu_custom_call.1} parent=1 // loop_pre_header
      _
    $region3: #{tpu_custom_call.1} parent=1 // loop_header
      %s11 = sphi 0, %s15
      %p12 = scmp.ge.s32.totalorder %s11, 4
      %s21 = sphi 0, %s23
      %s24 = sphi 0, %s21
      %s25 = sphi 0, %s24
      %s41 = sphi 0, %s25
      %s45 = sphi 0, %s45
      %s47 = sphi 0, %s45
      %s48 = sphi 0, %s47
      %s62 = sphi 0, %s48
      %s68 = sphi 0, %s70
      %s71 = sphi 0, %s68
      %s72 = sphi 0, %s71
      %s88 = sphi 0, %s72
    $region4: #{tpu_custom_call.1} parent=1 // loop_header_branch
      %14 = sbr.rel (%p12) target = $region8
    $region5: #{tpu_custom_call.1} parent=1 // loop_body
      %s16 = ssub.s32 %s11, 1
      %s17 = ssub.s32 %s11, 2
      %s18 = sadd.s32 %s11, 1
      %s19 = ssub.s32 %s11, %s18
      %p20 = scmp.eq.s32.totalorder %s19, 0
      %s22 = sadd.s32 %s21, 1
      %s23 = scalar_select %p20, %s21, %s22
      %p26 = pneg %p20
      %p27 = scmp.eq.s32.totalorder %s11, 1
      %p28 = por %p26, %p27
      %p29 = scmp.ne.s32.totalorder %s21, %s24
      %p30 = scmp.eq.s32.totalorder %s11, 0
      %p31 = por %p29, %p30
      %p32 = scmp.ne.s32.totalorder %s21, %s24
      %p33 = scmp.eq.s32.totalorder %s16, 1
      %p34 = por %p32, %p33
      %p35 = scmp.ne.s32.totalorder %s24, %s25
      %p36 = scmp.eq.s32.totalorder %s16, 0
      %p37 = por %p35, %p36
      %p38 = scmp.ne.s32.totalorder %s24, %s25
      %p39 = scmp.eq.s32.totalorder %s17, 1
      %p40 = por %p38, %p39
      %p42 = scmp.ne.s32.totalorder %s25, %s41
      %p43 = scmp.eq.s32.totalorder %s17, 0
      %p44 = por %p42, %p43
      %s46 = sadd.s32 %s45, 1
      %p49 = scmp.eq.s32.totalorder %s11, 1
      %p50 = scmp.ne.s32.totalorder %s45, %s47
      %p51 = scmp.eq.s32.totalorder %s11, 0
      %p52 = por %p50, %p51
      %p53 = scmp.ne.s32.totalorder %s45, %s47
      %p54 = scmp.eq.s32.totalorder %s16, 1
      %p55 = por %p53, %p54
      %p56 = scmp.ne.s32.totalorder %s47, %s48
      %p57 = scmp.eq.s32.totalorder %s16, 0
      %p58 = por %p56, %p57
      %p59 = scmp.ne.s32.totalorder %s47, %s48
      %p60 = scmp.eq.s32.totalorder %s17, 1
      %p61 = por %p59, %p60
      %p63 = scmp.ne.s32.totalorder %s48, %s62
      %p64 = scmp.eq.s32.totalorder %s17, 0
      %p65 = por %p63, %p64
      %s66 = ssub.s32 %s11, %s18
      %p67 = scmp.eq.s32.totalorder %s66, 0
      %s69 = sadd.s32 %s68, 1
      %s70 = scalar_select %p67, %s68, %s69
      %p73 = pneg %p67
      %p74 = scmp.eq.s32.totalorder %s11, 1
      %p75 = por %p73, %p74
      %p76 = scmp.ne.s32.totalorder %s68, %s71
      %p77 = scmp.eq.s32.totalorder %s11, 0
      %p78 = por %p76, %p77
      %p79 = scmp.ne.s32.totalorder %s68, %s71
      %p80 = scmp.eq.s32.totalorder %s16, 1
      %p81 = por %p79, %p80
      %p82 = scmp.ne.s32.totalorder %s71, %s72
      %p83 = scmp.eq.s32.totalorder %s16, 0
      %p84 = por %p82, %p83
      %p85 = scmp.ne.s32.totalorder %s71, %s72
      %p86 = scmp.eq.s32.totalorder %s17, 1
      %p87 = por %p85, %p86
      %p89 = scmp.ne.s32.totalorder %s72, %s88
      %p90 = scmp.eq.s32.totalorder %s17, 0
      %p91 = por %p89, %p90
      %p92 = scmp.le.s32.totalorder 1, %s11
      %p93 = scmp.lt.s32.totalorder %s11, 3
      %p94 = pnand %p92, %p93
      %p95 = pneg %p94
      // Predicated region
      $region9: #{tpu_custom_call.1} parent=5 // pred_check
        _
      $region10: #{tpu_custom_call.1} parent=5 // pred_check_branch
        %97 = sbr.rel (%p94) target = $region12
      $region11: #{tpu_custom_call.1} parent=5 // pred_region
        %s98 = ssub.s32 %s11, 1
        // Predicated region
        $region13: #{tpu_custom_call.1} parent=11 // pred_check
          %p99 = pneg %p58
        $region14: #{tpu_custom_call.1} parent=11 // pred_check_branch
          %101 = sbr.rel (%p99) target = $region16
        $region15: #{tpu_custom_call.1} parent=11 // pred_region
          _
        $region16: #{tpu_custom_call.1} parent=11 // pred_fallthru
          _
      $region12: #{tpu_custom_call.1} parent=5 // pred_fallthru
        _
      %p102 = scmp.lt.s32.totalorder %s11, 2
      // Predicated region
      $region17: #{tpu_custom_call.1} parent=5 // pred_check
        %p103 = pneg %p102
      $region18: #{tpu_custom_call.1} parent=5 // pred_check_branch
        %105 = sbr.rel (%p103) target = $region20
      $region19: #{tpu_custom_call.1} parent=5 // pred_region
        // Predicated region
        $region21: #{tpu_custom_call.1} parent=19 // pred_check
          %p106 = pneg %p31
        $region22: #{tpu_custom_call.1} parent=19 // pred_check_branch
          %108 = sbr.rel (%p106) target = $region24
        $region23: #{tpu_custom_call.1} parent=19 // pred_region
          %p109 = scmp.lt.s32.totalorder %s11, 1
          %s110 = scalar_select %p109, %s11, 1
          %s111 = smul.addr %s110, 8
          %s112 = scalar_lea.vmem %s0, %s111
        $region24: #{tpu_custom_call.1} parent=19 // pred_fallthru
          _
      $region20: #{tpu_custom_call.1} parent=5 // pred_fallthru
        _
      %p113 = scmp.le.s32.totalorder 1, %s11
      %p114 = scmp.lt.s32.totalorder %s11, 3
      %p115 = pnand %p113, %p114
      %p116 = pneg %p115
      // Predicated region
      $region25: #{tpu_custom_call.1} parent=5 // pred_check
        _
      $region26: #{tpu_custom_call.1} parent=5 // pred_check_branch
        %118 = sbr.rel (%p115) target = $region28
      $region27: #{tpu_custom_call.1} parent=5 // pred_region
        %s119 = ssub.s32 %s11, 1
        %p120 = scmp.lt.s32.totalorder %s16, 1
        %s121 = scalar_select %p120, %s16, 1
        %s122 = smul.addr %s121, 8
        %s123 = scalar_lea.vmem %s0, %s122
        %p124 = pneg %p37
        %p125 = pneg %p34
        %p126 = pneg %p58
        %p127 = pneg %p55
        %p128 = pneg %p84
        %p129 = pneg %p81
        %s130 = sand.u32 %s71, 1
        %s131 = scalar_lea.sflag [#allocation3], %s130
        %s132 = sand.u32 %s71, 1
        %s133 = smul.addr %s132, 8
        %s134 = scalar_lea.vmem [#allocation2], %s133
        %p135 = scmp.lt.s32.totalorder %s16, 1
        %s136 = scalar_select %p135, %s16, 1
        %s137 = smul.addr %s136, 8
        %s138 = scalar_lea.vmem %s0, %s137
        %v140 = vld [vmem:[%s138] sm:$0xff]
        %vm141 = vcmask 261120
        %v142 = vsel %vm141, %v140, 0.0
        %143 = vadd.xlane.f32.xlu0 %v142
        %v144 = vpop.xlane.xlu0 %143
        %v145 = vmul.f32 %v144, 0.03125
        %v146 = vsub.f32 %v140, %v145
        %v147 = vmul.f32 %v146, %v146
        %v148 = vsel %vm141, %v147, 0.0
        %149 = vadd.xlane.f32.xlu0 %v148
        %v150 = vpop.xlane.xlu0 %149
        %v151 = vmul.f32 %v150, 0.03125
        %v152 = vadd.f32 %v151, 1e-05
        %v153 = vrsqrt.pop %v152
        %v154 = vmul.f32 %v146, %v153
        %v155 = vpack.c.bf16 %v154, %v154
        %v156 = vld [vmem:[%s1] sm:$0xf]
        %v157 = vld [vmem:[%s1 + $0x4] sm:$0xf]
        %v158 = vld [vmem:[%s1 + $0x8] sm:$0xf]
        %v159 = vld [vmem:[%s1 + $0xc] sm:$0xf]
        %v164 = vunpack.c.l.b16 %v156
        %v165 = vunpack.c.l.b16 %v157
        %v166 = vunpack.c.l.b16 %v158
        %v167 = vunpack.c.l.b16 %v159
        %v168 = vpack.c.b16 %v165, %v164
        %v169 = vpack.c.b16 %v167, %v166
        %v173 = vsel %vm141, %v155, 0
        %175 = vmatprep.subr.bf16.mxu0 0
        %176 = vmatpush1.bf16.msra.mxu0 0
        %177 = vmatprep.subr.bf16.mxu0 0
        %178 = vmatpush1.bf16.msra.mxu0 0
        %179 = vmatprep.subr.bf16.mxu0 0
        %180 = vmatpush1.bf16.msra.mxu0 0
        %181 = vmatprep.subr.bf16.mxu0 0
        %182 = vmatpush1.bf16.msra.mxu0 0
        %183 = vmatprep.subr.bf16.mxu0 0
        %184 = vmatpush1.bf16.msra.mxu0 0
        %185 = vmatprep.subr.bf16.mxu0 0
        %186 = vmatpush1.bf16.msra.mxu0 0
        %187 = vmatprep.subr.bf16.mxu0 0
        %188 = vmatpush1.bf16.msra.mxu0 %v169
        %189 = vmatprep.subr.bf16.mxu0 0
        %190 = vmatpush1.bf16.msra.mxu0 %v168
        %191 = vmatprep.subr.bf16.mxu0 0
        %192 = vmatpush2.bf16.msra.mxu0 0
        %193 = vmatprep.subr.bf16.mxu0 0
        %194 = vmatpush2.bf16.msra.mxu0 0
        %195 = vmatprep.subr.bf16.mxu0 0
        %196 = vmatpush2.bf16.msra.mxu0 0
        %197 = vmatprep.subr.bf16.mxu0 0
        %198 = vmatpush2.bf16.msra.mxu0 0
        %199 = vmatprep.subr.bf16.mxu0 0
        %200 = vmatpush2.bf16.msra.mxu0 0
        %201 = vmatprep.subr.bf16.mxu0 0
        %202 = vmatpush2.bf16.msra.mxu0 0
        %203 = vmatprep.subr.bf16.mxu0 0
        %204 = vmatpush2.bf16.msra.mxu0 0
        %205 = vmatprep.subr.bf16.mxu0 0
        %206 = vmatpush2.bf16.msra.mxu0 0
        %207 = vmatprep.mubr.bf16.mxu0 0
        %208 = vmatmul.mubr.bf16.gmra.mxu0 %v173
        %v209 = vpop.f32.mrf.mxu0
        %v210 = vadd.f32 0.0, %v209
        %v211 = vpop.f32.mrf.mxu0
        %v212 = vpop.f32.mrf.mxu0
        %v213 = vpop.f32.mrf.mxu0
        %214 = vdwg.mxu0
        %v215 = vmul.f32 %v210, 0.5
        %v216 = vtanh.pop %v215
        %v217 = vadd.f32 %v216, 1.0
        %v218 = vmul.f32 %v217, 0.5
        %vm219 = vcmask 130048
        %220 = vst.msk [vmem:[%s134] sm:$0xff] %vm219, %v218
        %s221 = sand.u32 %s71, 1
        %s222 = scalar_lea.sflag [#allocation3], %s221
        %s223 = sand.u32 %s71, 1
        %s224 = smul.addr %s223, 8
        %s225 = scalar_lea.vmem [#allocation2], %s224
        // Predicated region
        $region29: #{tpu_custom_call.1} parent=27 // pred_check
          %p226 = pneg %p81
        $region30: #{tpu_custom_call.1} parent=27 // pred_check_branch
          %228 = sbr.rel (%p226) target = $region32
        $region31: #{tpu_custom_call.1} parent=27 // pred_region
          %s230 = ssub.s32 128, 128
          %231 = vsyncadd %s222, %s230
          %s232 = smul.addr %s16, 128
          %s233 = scalar_lea.hbm %s2, %s232
          %s235 = sshll.u32 %s225, 4
          %s236 = int_to_ptr.vmem [resolvable:$true] %s235
          %238 = dma.vmem_to_hbm [thread:$0]  %s236, 128, %s233, %s222
        $region32: #{tpu_custom_call.1} parent=27 // pred_fallthru
          _
      $region28: #{tpu_custom_call.1} parent=5 // pred_fallthru
        _
      %p239 = scmp.le.s32.totalorder 2, %s11
      // Predicated region
      $region33: #{tpu_custom_call.1} parent=5 // pred_check
        %p240 = pneg %p239
      $region34: #{tpu_custom_call.1} parent=5 // pred_check_branch
        %242 = sbr.rel (%p240) target = $region36
      $region35: #{tpu_custom_call.1} parent=5 // pred_region
        %s243 = ssub.s32 %s11, 2
        // Predicated region
        $region37: #{tpu_custom_call.1} parent=35 // pred_check
          %p244 = pneg %p87
        $region38: #{tpu_custom_call.1} parent=35 // pred_check_branch
          %246 = sbr.rel (%p244) target = $region40
        $region39: #{tpu_custom_call.1} parent=35 // pred_region
          %s247 = sand.u32 %s72, 1
          %s248 = scalar_lea.sflag [#allocation3], %s247
          %s249 = sand.u32 %s72, 1
          %s250 = smul.addr %s249, 8
          %s251 = scalar_lea.vmem [#allocation2], %s250
          %252 = dma.done %s248, 128
        $region40: #{tpu_custom_call.1} parent=35 // pred_fallthru
          _
      $region36: #{tpu_custom_call.1} parent=5 // pred_fallthru
        _
    $region6: #{tpu_custom_call.1} parent=1 // loop_footer
      %s15 = sadd.s32 1, %s11
    $region7: #{tpu_custom_call.1} parent=1 // loop_footer_branch
      %10 = sbr.rel target = $region3
    $region8: #{tpu_custom_call.1} parent=1 // loop_exit
      _
    %253 = vsyncpa [#allocation3], 1
    %s254 = scalar_lea.sflag [#allocation3], 1
    %255 = vsyncpa %s254, 1

</llo_original>
